<compile_context>
chip_gen: v6e
topology: v6e:2x2x1
jax: 0.10.0
libtpu: 0.0.40
codegen_flags: <defaults>
</compile_context>

<pallas_src>
import jax
import jax.numpy as jnp
from jax.experimental import pallas as pl
from jax.experimental.pallas import tpu as pltpu


def _add_kernel(x_ref, y_ref, o_ref):
    # Whole-tile elementwise add on the VPU.
    o_ref[...] = x_ref[...] + y_ref[...]


def _vmem_budget():
    """Return (tile_bytes_target, vmem_limit_bytes), generation-aware."""
    try:
        cap = int(pltpu.get_tpu_info().vmem_capacity_bytes)
    except Exception:
        cap = 64 << 20                      # conservative default: v7x per-TC VMEM
    if cap >= (128 << 20):                  # v5e / v6e (128 MiB physical VMEM)
        return 8 << 20, 64 << 20            # 3 refs x 2 bufs x 8 MiB = 48 MiB
    return 6 << 20, 48 << 20                # v7x / unknown: 36 MiB of buffers


def _choose_layout(n_elems, itemsize, tile_bytes):
    """Pick a lane-dense (rows, W) slab and a row tile TR for an elementwise op.

    Returns (rows, W, tr), or None when n_elems has no 128-multiple divisor
    (the caller then uses the plain XLA add -- no pad/slice HBM passes).
    """
    sub = max(8, (4 // itemsize) * 8)   # packed sublanes: 8 f32, 16 bf16, 32 int8

    # Widest lane-dense W dividing the flat size; prefer sublane-full row counts.
    w_any = None
    W = None
    for cand in (8192, 4096, 2048, 1024, 512, 256, 128):
        if n_elems % cand == 0:
            if w_any is None:
                w_any = cand
            if (n_elems // cand) >= sub:
                W = cand
                break
    if W is None:
        W = w_any
    if W is None:
        return None
    rows = n_elems // W

    # Row tile sized to ~tile_bytes, a multiple of `sub`.
    tr = max(sub, (tile_bytes // (W * itemsize) // sub) * sub)
    if tr >= rows:
        if rows >= 2 * sub and rows * W * itemsize >= (2 << 20):
            # A single block would cover a large slab: split it in two so the
            # "parallel" grid axis gives both v7x TensorCores work.
            tr = -(-((rows + 1) // 2) // sub) * sub
        else:
            tr = rows          # block == full first dim (always a legal block)
    return rows, W, tr


def tiny_model_add(x, y, *, xla_fallback_elems=256 * 1024):
    """TinyModel.forward(x, y) = x + y via a tiled, pipelined Pallas TPU kernel."""
    assert x.shape == y.shape and x.dtype == y.dtype
    orig_shape = x.shape
    n_elems = x.size
    itemsize = jnp.dtype(x.dtype).itemsize

    # Tiny tensors: fused XLA add beats pallas_call dispatch + grid-step cost.
    if n_elems < xla_fallback_elems:
        return x + y

    tile_bytes, vmem_limit = _vmem_budget()
    layout = _choose_layout(n_elems, itemsize, tile_bytes)
    if layout is None:
        # Flat size not a multiple of 128: padding/slicing would add whole HBM
        # passes, so the roofline choice is XLA's fused elementwise add.
        return x + y
    rows, W, tr = layout

    # Reshape of a contiguous array is free (no data movement).
    x_2d = x.reshape(rows, W)
    y_2d = y.reshape(rows, W)

    out_2d = pl.pallas_call(
        _add_kernel,
        out_shape=jax.ShapeDtypeStruct((rows, W), x.dtype),
        grid=(pl.cdiv(rows, tr),),      # ragged last block is masked by Pallas
        in_specs=[
            pl.BlockSpec((tr, W), lambda i: (i, 0)),
            pl.BlockSpec((tr, W), lambda i: (i, 0)),
        ],
        out_specs=pl.BlockSpec((tr, W), lambda i: (i, 0)),
        compiler_params=pltpu.CompilerParams(
            dimension_semantics=("parallel",),   # shards steps across TCs on v7x
            vmem_limit_bytes=vmem_limit,
        ),
    )(x_2d, y_2d)

    return out_2d.reshape(orig_shape)


if __name__ == "__main__":
    k0, k1, k2, k3 = jax.random.split(jax.random.PRNGKey(0), 4)

    # Small NCHW inputs matching the module: batch=2, channels=4, spatial=16x16.
    x = jax.random.normal(k0, (2, 4, 16, 16), dtype=jnp.float32)
    y = jax.random.normal(k1, (2, 4, 16, 16), dtype=jnp.float32)

    out = tiny_model_add(x, y, xla_fallback_elems=0)   # force the Pallas path
    jax.block_until_ready(out)
    ref = x + y
    assert out.shape == ref.shape and out.dtype == ref.dtype
    assert jnp.allclose(out, ref), "mismatch vs reference add (small)"

    # Medium check exercising the multi-step grid and the ragged last block.
    x2 = jax.random.normal(k2, (9, 8, 128, 64), dtype=jnp.float32)
    y2 = jax.random.normal(k3, (9, 8, 128, 64), dtype=jnp.float32)
    out2 = tiny_model_add(x2, y2)
    jax.block_until_ready(out2)
    assert jnp.allclose(out2, x2 + y2), "mismatch vs reference add (medium)"

    print("KERNEL_OK")
</pallas_src>

<mosaic_0001>
module attributes {stable_mosaic.version = 11 : i64} {
  func.func @_add_kernel(%arg0: i32, %arg1: memref<8x256xf32, #tpu.memory_space<vmem>>, %arg2: memref<8x256xf32, #tpu.memory_space<vmem>>, %arg3: memref<8x256xf32, #tpu.memory_space<vmem>>) attributes {dimension_semantics = [#tpu.dimension_semantics<parallel>], iteration_bounds = array<i64: 1>, scalar_prefetch = 0 : i64, scratch_operands = 0 : i64, tpu.core_type = #tpu.core_type<tc>, window_params = [{transform_indices = @transform_0, window_bounds = array<i64: 8, 256>}, {transform_indices = @transform_1, window_bounds = array<i64: 8, 256>}, {transform_indices = @transform_2, window_bounds = array<i64: 8, 256>}]} {
    %c0 = arith.constant 0 : index
    %c0_0 = arith.constant 0 : index
    %0 = vector.load %arg1[%c0, %c0_0] : memref<8x256xf32, #tpu.memory_space<vmem>>, vector<8x256xf32>
    %c0_1 = arith.constant 0 : index
    %c0_2 = arith.constant 0 : index
    %1 = vector.load %arg2[%c0_1, %c0_2] : memref<8x256xf32, #tpu.memory_space<vmem>>, vector<8x256xf32>
    %2 = arith.addf %0, %1 : vector<8x256xf32>
    %c0_3 = arith.constant 0 : index
    %c0_4 = arith.constant 0 : index
    %3 = vector.load %arg3[%c0_3, %c0_4] : memref<8x256xf32, #tpu.memory_space<vmem>>, vector<8x256xf32>
    tpu.vector_store %arg3[%c0_3, %c0_4], %2 {strides = array<i32>} : memref<8x256xf32, #tpu.memory_space<vmem>>, vector<8x256xf32>,
    return
  }
  func.func @transform_0(%arg0: i32) -> (i32, i32) {
    %c0_i32 = arith.constant 0 : i32
    %c0_i32_0 = arith.constant 0 : i32
    return %arg0, %c0_i32 : i32, i32
  }
  func.func @transform_1(%arg0: i32) -> (i32, i32) {
    %c0_i32 = arith.constant 0 : i32
    %c0_i32_0 = arith.constant 0 : i32
    return %arg0, %c0_i32 : i32, i32
  }
  func.func @transform_2(%arg0: i32) -> (i32, i32) {
    %c0_i32 = arith.constant 0 : i32
    %c0_i32_0 = arith.constant 0 : i32
    return %arg0, %c0_i32 : i32, i32
  }
}

</mosaic_0001>

<llo_original>
// kernel: tpu_custom_call.1
$region0: #{tpu_custom_call.1}
  #allocation0 [shape = 'u32[]', space=smem, size = 0x4, offset = 0x4, fixed_abs, tag = 'smem constant byte address 0x4 - core index']
  #allocation1 [shape = 'u32[144,128]{1,0:T(1,128)}', space=vmem, size = 0x12000, scoped, tag = 'internal scratch']
  %s0 = inlined_call_operand.hbm [shape: f32[8,256], index: 0, kind: input, shape index: {}]
  %s1 = inlined_call_operand.hbm [shape: f32[8,256], index: 1, kind: input, shape index: {}]
  %s2 = inlined_call_operand.hbm [shape: f32[8,256], index: 2, kind: output, shape index: {}]
  %s3 = sld [smem:[#allocation0]]
  $region26: #{tpu_custom_call.1} parent=0
    _
  %s5 = ssub.s32 1, %s3
  %s6 = scalar_select 0, %s5, %s3
  $region1: #{tpu_custom_call.1} parent=0
    #allocation2 [shape = 'u8[8192]{0}', space=vmem, size = 0x2000, scoped, tag = 'input window, operand 0, single buffered']
    #allocation3 [shape = 's32[1]{0}', space=sflag, size = 0x4, scoped, tag = 'scoped memory for tpu_custom_call.1']
    #allocation4 [shape = 's32[1]{0}', space=sflag, size = 0x4, scoped, tag = 'scoped memory for tpu_custom_call.1']
    #allocation5 [shape = 'u8[8192]{0}', space=vmem, size = 0x2000, scoped, tag = 'input window, operand 1, single buffered']
    #allocation6 [shape = 's32[1]{0}', space=sflag, size = 0x4, scoped, tag = 'scoped memory for tpu_custom_call.1']
    #allocation7 [shape = 'u8[8192]{0}', space=vmem, size = 0x2000, scoped, tag = 'output window, operand 0, single buffered']
    %7 = vsyncpa [#allocation3], 0
    %8 = vsyncpa [#allocation6], 0
    %9 = vsyncpa [#allocation4], 0
    // Predicated region
    $region2: #{tpu_custom_call.1} parent=1 // pred_check
      _
    $region3: #{tpu_custom_call.1} parent=1 // pred_check_branch
      %11 = sbr.rel (0) target = $region5
    $region4: #{tpu_custom_call.1} parent=1 // pred_region
      %s13 = ssub.s32 256, 256
      %14 = vsyncadd [#allocation3], %s13
      %s16 = sshll.u32 [#allocation2], 4
      %s17 = int_to_ptr.vmem [resolvable:$true] %s16
      %19 = dma.hbm_to_vmem [thread:$0]  %s0, 256, %s17, [#allocation3]
    $region5: #{tpu_custom_call.1} parent=1 // pred_fallthru
      _
    // Predicated region
    $region6: #{tpu_custom_call.1} parent=1 // pred_check
      _
    $region7: #{tpu_custom_call.1} parent=1 // pred_check_branch
      %21 = sbr.rel (0) target = $region9
    $region8: #{tpu_custom_call.1} parent=1 // pred_region
      %s23 = ssub.s32 256, 256
      %24 = vsyncadd [#allocation6], %s23
      %s26 = sshll.u32 [#allocation5], 4
      %s27 = int_to_ptr.vmem [resolvable:$true] %s26
      %29 = dma.hbm_to_vmem [thread:$0]  %s1, 256, %s27, [#allocation6]
    $region9: #{tpu_custom_call.1} parent=1 // pred_fallthru
      _
    // Predicated region
    $region10: #{tpu_custom_call.1} parent=1 // pred_check
      _
    $region11: #{tpu_custom_call.1} parent=1 // pred_check_branch
      %31 = sbr.rel (0) target = $region13
    $region12: #{tpu_custom_call.1} parent=1 // pred_region
      %32 = dma.done [#allocation3], 256
    $region13: #{tpu_custom_call.1} parent=1 // pred_fallthru
      _
    // Predicated region
    $region14: #{tpu_custom_call.1} parent=1 // pred_check
      _
    $region15: #{tpu_custom_call.1} parent=1 // pred_check_branch
      %34 = sbr.rel (0) target = $region17
    $region16: #{tpu_custom_call.1} parent=1 // pred_region
      %35 = dma.done [#allocation6], 256
    $region17: #{tpu_custom_call.1} parent=1 // pred_fallthru
      _
    %v36 = vld [vmem:[#allocation2] sm:$0xff]
    %v37 = vld [vmem:[#allocation2 + $0x8] sm:$0xff]
    %v38 = vld [vmem:[#allocation5] sm:$0xff]
    %v39 = vld [vmem:[#allocation5 + $0x8] sm:$0xff]
    %v40 = vadd.f32 %v36, %v38
    %v41 = vadd.f32 %v37, %v39
    %42 = vst [vmem:[#allocation7] sm:$0xff] %v40
    %43 = vst [vmem:[#allocation7 + $0x8] sm:$0xff] %v41
    // Predicated region
    $region18: #{tpu_custom_call.1} parent=1 // pred_check
      _
    $region19: #{tpu_custom_call.1} parent=1 // pred_check_branch
      %45 = sbr.rel (0) target = $region21
    $region20: #{tpu_custom_call.1} parent=1 // pred_region
      %s47 = ssub.s32 256, 256
      %48 = vsyncadd [#allocation4], %s47
      %s50 = sshll.u32 [#allocation7], 4
      %s51 = int_to_ptr.vmem [resolvable:$true] %s50
      %53 = dma.vmem_to_hbm [thread:$0]  %s51, 256, %s2, [#allocation4]
    $region21: #{tpu_custom_call.1} parent=1 // pred_fallthru
      _
    // Predicated region
    $region22: #{tpu_custom_call.1} parent=1 // pred_check
      _
    $region23: #{tpu_custom_call.1} parent=1 // pred_check_branch
      %55 = sbr.rel (0) target = $region25
    $region24: #{tpu_custom_call.1} parent=1 // pred_region
      %56 = dma.done [#allocation4], 256
    $region25: #{tpu_custom_call.1} parent=1 // pred_fallthru
      _
    %57 = vsyncpa [#allocation3], 1
    %58 = vsyncpa [#allocation6], 1
    %59 = vsyncpa [#allocation4], 1

</llo_original>
